<compile_context>
chip_gen: v6e
topology: v6e:2x2x1
jax: 0.10.0
libtpu: 0.0.40
codegen_flags: <defaults>
</compile_context>

<pallas_src>
import functools

import jax
import jax.numpy as jnp
from jax.experimental import pallas as pl
from jax.experimental.pallas import tpu as pltpu


def gcni_kernel(xT_ref, w1_ref, b1_ref, w2_ref, b2_ref, adjT_ref, o_ref, *, K):
    # lin1 + relu : [H, F]bf16 @ [F, N]bf16 -> [H, N]f32, bias broadcast along lanes.
    h = jnp.dot(w1_ref[...], xT_ref[...], preferred_element_type=jnp.float32)
    h = jnp.maximum(h + b1_ref[...], 0.0)

    # lin2 : [C, H]bf16 @ [H, N]bf16 -> [C, N]f32
    z = jnp.dot(w2_ref[...], h.astype(jnp.bfloat16),
                preferred_element_type=jnp.float32)
    z = z + b2_ref[...]

    # K propagation hops (unrolled, K static):  zT <- zT @ A^T   (== (A @ z)^T)
    adjT = adjT_ref[...]  # [N, N] bf16, A^T[src, dst] = norm
    for _ in range(K):
        z = jnp.dot(z.astype(jnp.bfloat16), adjT,
                    preferred_element_type=jnp.float32)

    # log_softmax over classes (sublane axis 0 of the transposed [C, N] layout), in f32.
    m = jnp.max(z, axis=0, keepdims=True)
    s = z - m
    lse = jnp.log(jnp.sum(jnp.exp(s), axis=0, keepdims=True))
    o_ref[...] = (s - lse).astype(o_ref.dtype)


def gcni_forward(x, w1, b1, w2, b2, adj, K):
    """x: [N, F] f32; w1: [H, F]; b1: [H]; w2: [C, H]; b2: [C]; adj: A[dst, src] f32."""
    N, F = x.shape
    H = w1.shape[0]
    C = w2.shape[0]

    # Lane-dense transposed layout + bf16 MXU operands (f32 accumulation inside kernel).
    xT = x.T.astype(jnp.bfloat16)        # [F, N]
    adjT = adj.T.astype(jnp.bfloat16)    # [N, N] = A^T
    w1b = w1.astype(jnp.bfloat16)        # [H, F]
    w2b = w2.astype(jnp.bfloat16)        # [C, H]
    b1c = b1.reshape(H, 1).astype(jnp.float32)
    b2c = b2.reshape(C, 1).astype(jnp.float32)

    flops = 2 * (N * F * H + N * H * C + K * N * N * C)
    bytes_accessed = int(
        2 * (xT.size + adjT.size + w1b.size + w2b.size)   # bf16 inputs
        + 4 * (b1c.size + b2c.size + N * C)               # f32 biases + output
    )

    vmem = pl.BlockSpec(memory_space=pltpu.MemorySpace.VMEM)
    outT = pl.pallas_call(
        functools.partial(gcni_kernel, K=K),
        out_shape=jax.ShapeDtypeStruct((C, N), jnp.float32),
        in_specs=[vmem] * 6,
        out_specs=vmem,
        compiler_params=pltpu.CompilerParams(vmem_limit_bytes=32 * 1024 * 1024),
        cost_estimate=pl.CostEstimate(
            flops=flops, transcendentals=N * C + N, bytes_accessed=bytes_accessed),
    )(xT, w1b, b1c, w2b, b2c, adjT)
    return outT.T  # [N, C]


if __name__ == "__main__":
    # Small deterministic problem; N=128 so the node (lane) axis is a full 128-lane tile.
    N, F, H, C, K = 128, 16, 32, 8, 3

    key = jax.random.PRNGKey(0)
    k1, k2, k3, k4, k5 = jax.random.split(key, 5)

    x = jax.random.normal(k1, (N, F), jnp.float32)
    # PyTorch Linear weight layout is [out, in]; kept native (kernel uses the transposed math).
    w1 = jax.random.normal(k2, (H, F), jnp.float32) * 0.1
    b1 = jax.random.normal(k3, (H,), jnp.float32) * 0.1
    w2 = jax.random.normal(k4, (C, H), jnp.float32) * 0.1
    b2 = jax.random.normal(k5, (C,), jnp.float32) * 0.1

    # Deterministic graph: self loops + ring edges (both directions), GCN-style edge norm.
    idx = jnp.arange(N)
    src = jnp.concatenate([idx, idx, (idx + 1) % N])
    dst = jnp.concatenate([idx, (idx + 1) % N, idx])
    deg = jnp.zeros((N,), jnp.float32).at[dst].add(1.0)
    norm = 1.0 / jnp.sqrt(deg[src] * deg[dst])            # edge_attr (norm)

    # Dense adjacency glue: A[dst, src] = sum of norm over duplicate edges (aggr='add').
    adj = jnp.zeros((N, N), jnp.float32).at[dst, src].add(norm)

    out = jax.block_until_ready(gcni_forward(x, w1, b1, w2, b2, adj, K))

    # Pure-JAX f32 reference (dropout identity in eval mode).
    h = jnp.maximum(x @ w1.T + b1, 0.0)
    z = h @ w2.T + b2
    for _ in range(K):
        z = adj @ z
    ref = jax.nn.log_softmax(z, axis=1)

    assert out.shape == (N, C)
    err = float(jnp.max(jnp.abs(out - ref)))
    assert jnp.allclose(out, ref, atol=2e-2, rtol=2e-2), f"max abs err {err}"

    print("KERNEL_OK")
</pallas_src>

<mosaic_0001>
module attributes {stable_mosaic.version = 11 : i64} {
  func.func @gcni_kernel(%arg0: memref<16x128xbf16, #tpu.memory_space<vmem>>, %arg1: memref<32x16xbf16, #tpu.memory_space<vmem>>, %arg2: memref<32x1xf32, #tpu.memory_space<vmem>>, %arg3: memref<8x32xbf16, #tpu.memory_space<vmem>>, %arg4: memref<8x1xf32, #tpu.memory_space<vmem>>, %arg5: memref<128x128xbf16, #tpu.memory_space<vmem>>, %arg6: memref<8x128xf32, #tpu.memory_space<vmem>>) attributes {dimension_semantics = [], scalar_prefetch = 0 : i64, scratch_operands = 0 : i64, tpu.core_type = #tpu.core_type<tc>} {
    %c0 = arith.constant 0 : index
    %c0_0 = arith.constant 0 : index
    %0 = vector.load %arg1[%c0, %c0_0] : memref<32x16xbf16, #tpu.memory_space<vmem>>, vector<32x16xbf16>
    %c0_1 = arith.constant 0 : index
    %c0_2 = arith.constant 0 : index
    %1 = vector.load %arg0[%c0_1, %c0_2] : memref<16x128xbf16, #tpu.memory_space<vmem>>, vector<16x128xbf16>
    %cst = arith.constant dense<0.000000e+00> : vector<32x128xf32>
    %2 = tpu.matmul %0, %1, %cst {dimension_numbers = #tpu.dot_dimension_numbers<[1], [0], [0], [1], [0, 0, 1, 1], [], []>} : vector<32x16xbf16>, vector<16x128xbf16>, vector<32x128xf32> -> vector<32x128xf32>
    %c0_3 = arith.constant 0 : index
    %c0_4 = arith.constant 0 : index
    %3 = vector.load %arg2[%c0_3, %c0_4] : memref<32x1xf32, #tpu.memory_space<vmem>>, vector<32x1xf32>
    %4 = vector.broadcast %3 : vector<32x1xf32> to vector<32x128xf32>
    %5 = arith.addf %2, %4 : vector<32x128xf32>
    %cst_5 = arith.constant 0.000000e+00 : f32
    %6 = vector.broadcast %cst_5 : f32 to vector<32x128xf32>
    %7 = arith.maximumf %5, %6 : vector<32x128xf32>
    %c0_6 = arith.constant 0 : index
    %c0_7 = arith.constant 0 : index
    %8 = vector.load %arg3[%c0_6, %c0_7] : memref<8x32xbf16, #tpu.memory_space<vmem>>, vector<8x32xbf16>
    %9 = arith.truncf %7 : vector<32x128xf32> to vector<32x128xbf16>
    %cst_8 = arith.constant dense<0.000000e+00> : vector<8x128xf32>
    %10 = tpu.matmul %8, %9, %cst_8 {dimension_numbers = #tpu.dot_dimension_numbers<[1], [0], [0], [1], [0, 0, 1, 1], [], []>} : vector<8x32xbf16>, vector<32x128xbf16>, vector<8x128xf32> -> vector<8x128xf32>
    %c0_9 = arith.constant 0 : index
    %c0_10 = arith.constant 0 : index
    %11 = vector.load %arg4[%c0_9, %c0_10] : memref<8x1xf32, #tpu.memory_space<vmem>>, vector<8x1xf32>
    %12 = vector.broadcast %11 : vector<8x1xf32> to vector<8x128xf32>
    %13 = arith.addf %10, %12 : vector<8x128xf32>
    %c0_11 = arith.constant 0 : index
    %c0_12 = arith.constant 0 : index
    %14 = vector.load %arg5[%c0_11, %c0_12] : memref<128x128xbf16, #tpu.memory_space<vmem>>, vector<128x128xbf16>
    %15 = arith.truncf %13 : vector<8x128xf32> to vector<8x128xbf16>
    %cst_13 = arith.constant dense<0.000000e+00> : vector<8x128xf32>
    %16 = tpu.matmul %15, %14, %cst_13 {dimension_numbers = #tpu.dot_dimension_numbers<[1], [0], [0], [1], [0, 0, 1, 1], [], []>} : vector<8x128xbf16>, vector<128x128xbf16>, vector<8x128xf32> -> vector<8x128xf32>
    %17 = arith.truncf %16 : vector<8x128xf32> to vector<8x128xbf16>
    %cst_14 = arith.constant dense<0.000000e+00> : vector<8x128xf32>
    %18 = tpu.matmul %17, %14, %cst_14 {dimension_numbers = #tpu.dot_dimension_numbers<[1], [0], [0], [1], [0, 0, 1, 1], [], []>} : vector<8x128xbf16>, vector<128x128xbf16>, vector<8x128xf32> -> vector<8x128xf32>
    %19 = arith.truncf %18 : vector<8x128xf32> to vector<8x128xbf16>
    %cst_15 = arith.constant dense<0.000000e+00> : vector<8x128xf32>
    %20 = tpu.matmul %19, %14, %cst_15 {dimension_numbers = #tpu.dot_dimension_numbers<[1], [0], [0], [1], [0, 0, 1, 1], [], []>} : vector<8x128xbf16>, vector<128x128xbf16>, vector<8x128xf32> -> vector<8x128xf32>
    %cst_16 = arith.constant dense<0xFF800000> : vector<128xf32>
    %21 = vector.multi_reduction <maximumf>, %20, %cst_16 [0] : vector<8x128xf32> to vector<128xf32>
    %22 = vector.shape_cast %21 : vector<128xf32> to vector<1x128xf32>
    %23 = vector.broadcast %22 : vector<1x128xf32> to vector<8x128xf32>
    %24 = arith.subf %20, %23 : vector<8x128xf32>
    %25 = math.exp %24 : vector<8x128xf32>
    %cst_17 = arith.constant dense<0.000000e+00> : vector<128xf32>
    %26 = vector.multi_reduction <add>, %25, %cst_17 [0] : vector<8x128xf32> to vector<128xf32>
    %27 = vector.shape_cast %26 : vector<128xf32> to vector<1x128xf32>
    %28 = math.log %27 : vector<1x128xf32>
    %29 = vector.broadcast %28 : vector<1x128xf32> to vector<8x128xf32>
    %30 = arith.subf %24, %29 : vector<8x128xf32>
    %c0_18 = arith.constant 0 : index
    %c0_19 = arith.constant 0 : index
    %31 = vector.load %arg6[%c0_18, %c0_19] : memref<8x128xf32, #tpu.memory_space<vmem>>, vector<8x128xf32>
    tpu.vector_store %arg6[%c0_18, %c0_19], %30 {strides = array<i32>} : memref<8x128xf32, #tpu.memory_space<vmem>>, vector<8x128xf32>,
    return
  }
}

</mosaic_0001>

<llo_original>
// kernel: tpu_custom_call.1
$region0: #{tpu_custom_call.1}
  #allocation0 [shape = 'u32[]', space=smem, size = 0x4, offset = 0x4, fixed_abs, tag = 'smem constant byte address 0x4 - core index']
  #allocation1 [shape = 'u32[144,128]{1,0:T(1,128)}', space=vmem, size = 0x12000, scoped, tag = 'internal scratch']
  %s0 = inlined_call_operand.vmem [shape: bf16[16,128], index: 0, kind: input, shape index: {}]
  %s1 = inlined_call_operand.vmem [shape: bf16[32,16], index: 1, kind: input, shape index: {}]
  %s2 = inlined_call_operand.vmem [shape: f32[32,1], index: 2, kind: input, shape index: {}]
  %s3 = inlined_call_operand.hbm [shape: bf16[8,32], index: 3, kind: input, shape index: {}]
  %s4 = inlined_call_operand.vmem [shape: f32[8,1], index: 4, kind: input, shape index: {}]
  %s5 = inlined_call_operand.vmem [shape: bf16[128,128], index: 5, kind: input, shape index: {}]
  %s6 = inlined_call_operand.hbm [shape: f32[8,128], index: 6, kind: output, shape index: {}]
  %s7 = sld [smem:[#allocation0]]
  $region38: #{tpu_custom_call.1} parent=0
    _
  %s9 = ssub.s32 1, %s7
  %s10 = scalar_select 0, %s9, %s7
  $region1: #{tpu_custom_call.1} parent=0
    #allocation2 [shape = 'u8[2048]{0}', space=vmem, size = 0x800, scoped, tag = 'input window, operand 3, single buffered']
    #allocation3 [shape = 's32[1]{0}', space=sflag, size = 0x4, scoped, tag = 'scoped memory for tpu_custom_call.1']
    #allocation4 [shape = 's32[1]{0}', space=sflag, size = 0x4, scoped, tag = 'scoped memory for tpu_custom_call.1']
    #allocation5 [shape = 'u8[4096]{0}', space=vmem, size = 0x1000, scoped, tag = 'output window, operand 0, single buffered']
    %11 = vsyncpa [#allocation3], 0
    %12 = vsyncpa [#allocation4], 0
    // Predicated region
    $region2: #{tpu_custom_call.1} parent=1 // pred_check
      _
    $region3: #{tpu_custom_call.1} parent=1 // pred_check_branch
      %14 = sbr.rel (0) target = $region5
    $region4: #{tpu_custom_call.1} parent=1 // pred_region
      _
    $region5: #{tpu_custom_call.1} parent=1 // pred_fallthru
      _
    // Predicated region
    $region6: #{tpu_custom_call.1} parent=1 // pred_check
      _
    $region7: #{tpu_custom_call.1} parent=1 // pred_check_branch
      %16 = sbr.rel (0) target = $region9
    $region8: #{tpu_custom_call.1} parent=1 // pred_region
      _
    $region9: #{tpu_custom_call.1} parent=1 // pred_fallthru
      _
    // Predicated region
    $region10: #{tpu_custom_call.1} parent=1 // pred_check
      _
    $region11: #{tpu_custom_call.1} parent=1 // pred_check_branch
      %18 = sbr.rel (0) target = $region13
    $region12: #{tpu_custom_call.1} parent=1 // pred_region
      _
    $region13: #{tpu_custom_call.1} parent=1 // pred_fallthru
      _
    // Predicated region
    $region14: #{tpu_custom_call.1} parent=1 // pred_check
      _
    $region15: #{tpu_custom_call.1} parent=1 // pred_check_branch
      %20 = sbr.rel (0) target = $region17
    $region16: #{tpu_custom_call.1} parent=1 // pred_region
      %s22 = ssub.s32 64, 64
      %23 = vsyncadd [#allocation3], %s22
      %s25 = sshll.u32 [#allocation2], 4
      %s26 = int_to_ptr.vmem [resolvable:$true] %s25
      %28 = dma.hbm_to_vmem [thread:$0]  %s3, 64, %s26, [#allocation3]
    $region17: #{tpu_custom_call.1} parent=1 // pred_fallthru
      _
    // Predicated region
    $region18: #{tpu_custom_call.1} parent=1 // pred_check
      _
    $region19: #{tpu_custom_call.1} parent=1 // pred_check_branch
      %30 = sbr.rel (0) target = $region21
    $region20: #{tpu_custom_call.1} parent=1 // pred_region
      _
    $region21: #{tpu_custom_call.1} parent=1 // pred_fallthru
      _
    // Predicated region
    $region22: #{tpu_custom_call.1} parent=1 // pred_check
      _
    $region23: #{tpu_custom_call.1} parent=1 // pred_check_branch
      %32 = sbr.rel (0) target = $region25
    $region24: #{tpu_custom_call.1} parent=1 // pred_region
      _
    $region25: #{tpu_custom_call.1} parent=1 // pred_fallthru
      _
    // Predicated region
    $region26: #{tpu_custom_call.1} parent=1 // pred_check
      _
    $region27: #{tpu_custom_call.1} parent=1 // pred_check_branch
      %34 = sbr.rel (0) target = $region29
    $region28: #{tpu_custom_call.1} parent=1 // pred_region
      %35 = dma.done [#allocation3], 64
    $region29: #{tpu_custom_call.1} parent=1 // pred_fallthru
      _
    %v37 = vld [vmem:[%s1] sm:$0xf]
    %v38 = vld [vmem:[%s1 + $0x4] sm:$0xf]
    %v39 = vld [vmem:[%s1 + $0x8] sm:$0xf]
    %v40 = vld [vmem:[%s1 + $0xc] sm:$0xf]
    %v41 = vld [vmem:[%s0] sm:$0xf]
    %v42 = vld [vmem:[%s0 + $0x4] sm:$0xf]
    %v43 = vld [vmem:[%s2] sm:$0xff]
    %v44 = vld [vmem:[%s2 + $0x8] sm:$0xff]
    %v45 = vld [vmem:[%s2 + $0x10] sm:$0xff]
    %v46 = vld [vmem:[%s2 + $0x18] sm:$0xff]
    %48 = vset.pattern.permute.xlu0 0
    %49 = vperm.xlu0 %48, %v43
    %v50 = vpop.permute.xlu0 %49
    %53 = vset.pattern.permute.xlu0 0
    %54 = vperm.xlu0 %53, %v44
    %v55 = vpop.permute.xlu0 %54
    %58 = vset.pattern.permute.xlu0 0
    %59 = vperm.xlu0 %58, %v45
    %v60 = vpop.permute.xlu0 %59
    %63 = vset.pattern.permute.xlu0 0
    %64 = vperm.xlu0 %63, %v46
    %v65 = vpop.permute.xlu0 %64
    %v71 = vunpack.c.l.b16 %v37
    %v72 = vunpack.c.l.b16 %v38
    %v73 = vunpack.c.l.b16 %v39
    %v74 = vunpack.c.l.b16 %v40
    %v75 = vpack.c.b16 %v72, %v71
    %v76 = vpack.c.b16 %v74, %v73
    %v79 = vunpack.c.l.b16 %v41
    %v80 = vunpack.c.l.b16 %v42
    %v81 = vpack.c.b16 %v80, %v79
    %vm83 = vcmask 130048
    %v85 = vsel %vm83, %v75, 0
    %v88 = vsel %vm83, %v76, 0
    %90 = vmatprep.subr.bf16.mxu0 0
    %91 = vmatpush1.bf16.msra.mxu0 0
    %92 = vmatprep.subr.bf16.mxu0 0
    %93 = vmatpush1.bf16.msra.mxu0 0
    %94 = vmatprep.subr.bf16.mxu0 0
    %95 = vmatpush1.bf16.msra.mxu0 0
    %96 = vmatprep.subr.bf16.mxu0 0
    %97 = vmatpush1.bf16.msra.mxu0 0
    %98 = vmatprep.subr.bf16.mxu0 0
    %99 = vmatpush1.bf16.msra.mxu0 0
    %100 = vmatprep.subr.bf16.mxu0 0
    %101 = vmatpush1.bf16.msra.mxu0 0
    %102 = vmatprep.subr.bf16.mxu0 0
    %103 = vmatpush1.bf16.msra.mxu0 0
    %104 = vmatprep.subr.bf16.mxu0 0
    %105 = vmatpush1.bf16.msra.mxu0 %v81
    %106 = vmatprep.subr.bf16.mxu0 0
    %107 = vmatpush2.bf16.msra.mxu0 0
    %108 = vmatprep.subr.bf16.mxu0 0
    %109 = vmatpush2.bf16.msra.mxu0 0
    %110 = vmatprep.subr.bf16.mxu0 0
    %111 = vmatpush2.bf16.msra.mxu0 0
    %112 = vmatprep.subr.bf16.mxu0 0
    %113 = vmatpush2.bf16.msra.mxu0 0
    %114 = vmatprep.subr.bf16.mxu0 0
    %115 = vmatpush2.bf16.msra.mxu0 0
    %116 = vmatprep.subr.bf16.mxu0 0
    %117 = vmatpush2.bf16.msra.mxu0 0
    %118 = vmatprep.subr.bf16.mxu0 0
    %119 = vmatpush2.bf16.msra.mxu0 0
    %120 = vmatprep.subr.bf16.mxu0 0
    %121 = vmatpush2.bf16.msra.mxu0 0
    %122 = vmatprep.mubr.bf16.mxu0 0
    %123 = vmatmul.mubr.bf16.gmra.mxu0 %v85
    %v124 = vpop.f32.mrf.mxu0
    %v125 = vadd.f32 %v50, %v124
    %v126 = vpop.f32.mrf.mxu0
    %v127 = vpop.f32.mrf.mxu0
    %v128 = vadd.f32 %v55, %v127
    %v129 = vpop.f32.mrf.mxu0
    %130 = vmatprep.mubr.bf16.mxu0 0
    %131 = vmatmul.mubr.bf16.gmra.mxu0 %v88
    %v132 = vpop.f32.mrf.mxu0
    %v133 = vadd.f32 %v60, %v132
    %v134 = vpop.f32.mrf.mxu0
    %v135 = vpop.f32.mrf.mxu0
    %v136 = vadd.f32 %v65, %v135
    %v137 = vpop.f32.mrf.mxu0
    %138 = vdwg.mxu0
    %v139 = vmax.f32 %v125, 0.0
    %v140 = vmax.f32 %v128, 0.0
    %v141 = vmax.f32 %v133, 0.0
    %v142 = vmax.f32 %v136, 0.0
    %v143 = vld [vmem:[#allocation2] sm:$0xf]
    %v144 = vpack.c.bf16 %v140, %v139
    %v145 = vpack.c.bf16 %v142, %v141
    %v146 = vld [vmem:[%s4] sm:$0xff]
    %148 = vset.pattern.permute.xlu0 0
    %149 = vperm.xlu0 %148, %v146
    %v150 = vpop.permute.xlu0 %149
    %vm152 = vcmask 261120
    %v154 = vsel %vm152, %v143, 0
    %156 = vmatprep.subr.bf16.mxu0 0
    %157 = vmatpush1.bf16.msra.mxu0 0
    %158 = vmatprep.subr.bf16.mxu0 0
    %159 = vmatpush1.bf16.msra.mxu0 0
    %160 = vmatprep.subr.bf16.mxu0 0
    %161 = vmatpush1.bf16.msra.mxu0 0
    %162 = vmatprep.subr.bf16.mxu0 0
    %163 = vmatpush1.bf16.msra.mxu0 0
    %164 = vmatprep.subr.bf16.mxu0 0
    %165 = vmatpush1.bf16.msra.mxu0 0
    %166 = vmatprep.subr.bf16.mxu0 0
    %167 = vmatpush1.bf16.msra.mxu0 0
    %168 = vmatprep.subr.bf16.mxu0 0
    %169 = vmatpush1.bf16.msra.mxu0 %v145
    %170 = vmatprep.subr.bf16.mxu0 0
    %171 = vmatpush1.bf16.msra.mxu0 %v144
    %172 = vmatprep.subr.bf16.mxu0 0
    %173 = vmatpush2.bf16.msra.mxu0 0
    %174 = vmatprep.subr.bf16.mxu0 0
    %175 = vmatpush2.bf16.msra.mxu0 0
    %176 = vmatprep.subr.bf16.mxu0 0
    %177 = vmatpush2.bf16.msra.mxu0 0
    %178 = vmatprep.subr.bf16.mxu0 0
    %179 = vmatpush2.bf16.msra.mxu0 0
    %180 = vmatprep.subr.bf16.mxu0 0
    %181 = vmatpush2.bf16.msra.mxu0 0
    %182 = vmatprep.subr.bf16.mxu0 0
    %183 = vmatpush2.bf16.msra.mxu0 0
    %184 = vmatprep.subr.bf16.mxu0 0
    %185 = vmatpush2.bf16.msra.mxu0 0
    %186 = vmatprep.subr.bf16.mxu0 0
    %187 = vmatpush2.bf16.msra.mxu0 0
    %188 = vmatprep.mubr.bf16.mxu0 0
    %189 = vmatmul.mubr.bf16.gmra.mxu0 %v154
    %v190 = vpop.f32.mrf.mxu0
    %v191 = vadd.f32 %v150, %v190
    %v192 = vpop.f32.mrf.mxu0
    %v193 = vpop.f32.mrf.mxu0
    %v194 = vpop.f32.mrf.mxu0
    %195 = vdwg.mxu0
    %v196 = vld [vmem:[%s5] sm:$0xf]
    %v197 = vld [vmem:[%s5 + $0x4] sm:$0xf]
    %v198 = vld [vmem:[%s5 + $0x8] sm:$0xf]
    %v199 = vld [vmem:[%s5 + $0xc] sm:$0xf]
    %v200 = vld [vmem:[%s5 + $0x10] sm:$0xf]
    %v201 = vld [vmem:[%s5 + $0x14] sm:$0xf]
    %v202 = vld [vmem:[%s5 + $0x18] sm:$0xf]
    %v203 = vld [vmem:[%s5 + $0x1c] sm:$0xf]
    %v204 = vld [vmem:[%s5 + $0x20] sm:$0xf]
    %v205 = vld [vmem:[%s5 + $0x24] sm:$0xf]
    %v206 = vld [vmem:[%s5 + $0x28] sm:$0xf]
    %v207 = vld [vmem:[%s5 + $0x2c] sm:$0xf]
    %v208 = vld [vmem:[%s5 + $0x30] sm:$0xf]
    %v209 = vld [vmem:[%s5 + $0x34] sm:$0xf]
    %v210 = vld [vmem:[%s5 + $0x38] sm:$0xf]
    %v211 = vld [vmem:[%s5 + $0x3c] sm:$0xf]
    %v212 = vpack.c.bf16 %v191, %v191
    %v229 = vunpack.c.l.b16 %v196
    %v230 = vunpack.c.l.b16 %v197
    %v231 = vunpack.c.l.b16 %v198
    %v232 = vunpack.c.l.b16 %v199
    %v233 = vunpack.c.l.b16 %v200
    %v234 = vunpack.c.l.b16 %v201
    %v235 = vunpack.c.l.b16 %v202
    %v236 = vunpack.c.l.b16 %v203
    %v237 = vunpack.c.l.b16 %v204
    %v238 = vunpack.c.l.b16 %v205
    %v239 = vunpack.c.l.b16 %v206
    %v240 = vunpack.c.l.b16 %v207
    %v241 = vunpack.c.l.b16 %v208
    %v242 = vunpack.c.l.b16 %v209
    %v243 = vunpack.c.l.b16 %v210
    %v244 = vunpack.c.l.b16 %v211
    %v245 = vpack.c.b16 %v230, %v229
    %v246 = vpack.c.b16 %v232, %v231
    %v247 = vpack.c.b16 %v234, %v233
    %v248 = vpack.c.b16 %v236, %v235
    %v249 = vpack.c.b16 %v238, %v237
    %v250 = vpack.c.b16 %v240, %v239
    %v251 = vpack.c.b16 %v242, %v241
    %v252 = vpack.c.b16 %v244, %v243
    %261 = vmatprep.subr.bf16.mxu0 0
    %262 = vmatpush1.bf16.msra.mxu0 %v252
    %263 = vmatprep.subr.bf16.mxu0 0
    %264 = vmatpush1.bf16.msra.mxu0 %v251
    %265 = vmatprep.subr.bf16.mxu0 0
    %266 = vmatpush1.bf16.msra.mxu0 %v250
    %267 = vmatprep.subr.bf16.mxu0 0
    %268 = vmatpush1.bf16.msra.mxu0 %v249
    %269 = vmatprep.subr.bf16.mxu0 0
    %270 = vmatpush1.bf16.msra.mxu0 %v248
    %271 = vmatprep.subr.bf16.mxu0 0
    %272 = vmatpush1.bf16.msra.mxu0 %v247
    %273 = vmatprep.subr.bf16.mxu0 0
    %274 = vmatpush1.bf16.msra.mxu0 %v246
    %275 = vmatprep.subr.bf16.mxu0 0
    %276 = vmatpush1.bf16.msra.mxu0 %v245
    %277 = vmatprep.subr.bf16.mxu0 0
    %278 = vmatpush2.bf16.msra.mxu0 0
    %279 = vmatprep.subr.bf16.mxu0 0
    %280 = vmatpush2.bf16.msra.mxu0 0
    %281 = vmatprep.subr.bf16.mxu0 0
    %282 = vmatpush2.bf16.msra.mxu0 0
    %283 = vmatprep.subr.bf16.mxu0 0
    %284 = vmatpush2.bf16.msra.mxu0 0
    %285 = vmatprep.subr.bf16.mxu0 0
    %286 = vmatpush2.bf16.msra.mxu0 0
    %287 = vmatprep.subr.bf16.mxu0 0
    %288 = vmatpush2.bf16.msra.mxu0 0
    %289 = vmatprep.subr.bf16.mxu0 0
    %290 = vmatpush2.bf16.msra.mxu0 0
    %291 = vmatprep.subr.bf16.mxu0 0
    %292 = vmatpush2.bf16.msra.mxu0 0
    %293 = vmatprep.mubr.bf16.mxu0 0
    %294 = vmatmul.mubr.bf16.gmra.mxu0 %v212
    %v295 = vpop.f32.mrf.mxu0
    %v296 = vadd.f32 0.0, %v295
    %v297 = vpop.f32.mrf.mxu0
    %v298 = vpop.f32.mrf.mxu0
    %v299 = vpop.f32.mrf.mxu0
    %300 = vdwg.mxu0
    %v301 = vpack.c.bf16 %v296, %v296
    %302 = vmatprep.subr.bf16.mxu0 0
    %303 = vmatpush1.bf16.msra.mxu0 %v252
    %304 = vmatprep.subr.bf16.mxu0 0
    %305 = vmatpush1.bf16.msra.mxu0 %v251
    %306 = vmatprep.subr.bf16.mxu0 0
    %307 = vmatpush1.bf16.msra.mxu0 %v250
    %308 = vmatprep.subr.bf16.mxu0 0
    %309 = vmatpush1.bf16.msra.mxu0 %v249
    %310 = vmatprep.subr.bf16.mxu0 0
    %311 = vmatpush1.bf16.msra.mxu0 %v248
    %312 = vmatprep.subr.bf16.mxu0 0
    %313 = vmatpush1.bf16.msra.mxu0 %v247
    %314 = vmatprep.subr.bf16.mxu0 0
    %315 = vmatpush1.bf16.msra.mxu0 %v246
    %316 = vmatprep.subr.bf16.mxu0 0
    %317 = vmatpush1.bf16.msra.mxu0 %v245
    %318 = vmatprep.subr.bf16.mxu0 0
    %319 = vmatpush2.bf16.msra.mxu0 0
    %320 = vmatprep.subr.bf16.mxu0 0
    %321 = vmatpush2.bf16.msra.mxu0 0
    %322 = vmatprep.subr.bf16.mxu0 0
    %323 = vmatpush2.bf16.msra.mxu0 0
    %324 = vmatprep.subr.bf16.mxu0 0
    %325 = vmatpush2.bf16.msra.mxu0 0
    %326 = vmatprep.subr.bf16.mxu0 0
    %327 = vmatpush2.bf16.msra.mxu0 0
    %328 = vmatprep.subr.bf16.mxu0 0
    %329 = vmatpush2.bf16.msra.mxu0 0
    %330 = vmatprep.subr.bf16.mxu0 0
    %331 = vmatpush2.bf16.msra.mxu0 0
    %332 = vmatprep.subr.bf16.mxu0 0
    %333 = vmatpush2.bf16.msra.mxu0 0
    %334 = vmatprep.mubr.bf16.mxu0 0
    %335 = vmatmul.mubr.bf16.gmra.mxu0 %v301
    %v336 = vpop.f32.mrf.mxu0
    %v337 = vadd.f32 0.0, %v336
    %v338 = vpop.f32.mrf.mxu0
    %v339 = vpop.f32.mrf.mxu0
    %v340 = vpop.f32.mrf.mxu0
    %341 = vdwg.mxu0
    %v342 = vpack.c.bf16 %v337, %v337
    %343 = vmatprep.subr.bf16.mxu0 0
    %344 = vmatpush1.bf16.msra.mxu0 %v252
    %345 = vmatprep.subr.bf16.mxu0 0
    %346 = vmatpush1.bf16.msra.mxu0 %v251
    %347 = vmatprep.subr.bf16.mxu0 0
    %348 = vmatpush1.bf16.msra.mxu0 %v250
    %349 = vmatprep.subr.bf16.mxu0 0
    %350 = vmatpush1.bf16.msra.mxu0 %v249
    %351 = vmatprep.subr.bf16.mxu0 0
    %352 = vmatpush1.bf16.msra.mxu0 %v248
    %353 = vmatprep.subr.bf16.mxu0 0
    %354 = vmatpush1.bf16.msra.mxu0 %v247
    %355 = vmatprep.subr.bf16.mxu0 0
    %356 = vmatpush1.bf16.msra.mxu0 %v246
    %357 = vmatprep.subr.bf16.mxu0 0
    %358 = vmatpush1.bf16.msra.mxu0 %v245
    %359 = vmatprep.subr.bf16.mxu0 0
    %360 = vmatpush2.bf16.msra.mxu0 0
    %361 = vmatprep.subr.bf16.mxu0 0
    %362 = vmatpush2.bf16.msra.mxu0 0
    %363 = vmatprep.subr.bf16.mxu0 0
    %364 = vmatpush2.bf16.msra.mxu0 0
    %365 = vmatprep.subr.bf16.mxu0 0
    %366 = vmatpush2.bf16.msra.mxu0 0
    %367 = vmatprep.subr.bf16.mxu0 0
    %368 = vmatpush2.bf16.msra.mxu0 0
    %369 = vmatprep.subr.bf16.mxu0 0
    %370 = vmatpush2.bf16.msra.mxu0 0
    %371 = vmatprep.subr.bf16.mxu0 0
    %372 = vmatpush2.bf16.msra.mxu0 0
    %373 = vmatprep.subr.bf16.mxu0 0
    %374 = vmatpush2.bf16.msra.mxu0 0
    %375 = vmatprep.mubr.bf16.mxu0 0
    %376 = vmatmul.mubr.bf16.gmra.mxu0 %v342
    %v377 = vpop.f32.mrf.mxu0
    %v378 = vadd.f32 0.0, %v377
    %v379 = vpop.f32.mrf.mxu0
    %v380 = vpop.f32.mrf.mxu0
    %v381 = vpop.f32.mrf.mxu0
    %382 = vdwg.mxu0
    %v383 = vrot.slane %v378, 4
    %v384 = vmax.f32 %v378, %v383
    %v385 = vrot.slane %v384, 2
    %v386 = vmax.f32 %v384, %v385
    %v387 = vrot.slane %v386, 1
    %v388 = vmax.f32 %v386, %v387
    %v389 = vsub.f32 %v378, %v388
    %v390 = vmul.f32 %v389, 1.442695
    %v391 = vpow.pop %v390
    %v392 = vrot.slane %v391, 4
    %v393 = vadd.f32 %v391, %v392
    %v394 = vrot.slane %v393, 2
    %v395 = vadd.f32 %v393, %v394
    %v396 = vrot.slane %v395, 1
    %v397 = vadd.f32 %v395, %v396
    %v398 = vlog2.pop %v397
    %v399 = vmul.f32 %v398, 0.6931472
    %v400 = vsub.f32 %v389, %v399
    %401 = vst [vmem:[#allocation5] sm:$0xff] %v400
    // Predicated region
    $region30: #{tpu_custom_call.1} parent=1 // pred_check
      _
    $region31: #{tpu_custom_call.1} parent=1 // pred_check_branch
      %403 = sbr.rel (0) target = $region33
    $region32: #{tpu_custom_call.1} parent=1 // pred_region
      %s405 = ssub.s32 128, 128
      %406 = vsyncadd [#allocation4], %s405
      %s408 = sshll.u32 [#allocation5], 4
      %s409 = int_to_ptr.vmem [resolvable:$true] %s408
      %411 = dma.vmem_to_hbm [thread:$0]  %s409, 128, %s6, [#allocation4]
    $region33: #{tpu_custom_call.1} parent=1 // pred_fallthru
      _
    // Predicated region
    $region34: #{tpu_custom_call.1} parent=1 // pred_check
      _
    $region35: #{tpu_custom_call.1} parent=1 // pred_check_branch
      %413 = sbr.rel (0) target = $region37
    $region36: #{tpu_custom_call.1} parent=1 // pred_region
      %414 = dma.done [#allocation4], 128
    $region37: #{tpu_custom_call.1} parent=1 // pred_fallthru
      _
    %415 = vsyncpa [#allocation3], 1
    %416 = vsyncpa [#allocation4], 1

</llo_original>
